<compile_context>
chip_gen: v7x
topology: tpu7x:2x2x1
jax: 0.10.0
libtpu: 0.0.40
codegen_flags: <defaults>
</compile_context>

<pallas_src>
import functools

import jax
import jax.numpy as jnp
from jax.experimental import pallas as pl
from jax.experimental.pallas import tpu as pltpu


def _round_up(n: int, m: int) -> int:
    return ((n + m - 1) // m) * m


def _policy_net_kernel(xT_ref, w1T_ref, b1_ref, w2T_ref, b2_ref, outT_ref,
                       *, eb_sb: bool, action_bound: float):
    # All operands are in the batch-on-lanes layout:
    #   xT  : (state_dim, TB)      w1T : (hidden, state_dim)   b1 : (hidden, 1)
    #   outT: (action_dim, TB)     w2T : (action_dim, hidden)  b2 : (action_dim, 1)
    # fc1 + ReLU (MXU matmul, f32 accumulation; epilogue in f32)
    h = jnp.dot(w1T_ref[...], xT_ref[...], preferred_element_type=jnp.float32)
    h = jnp.maximum(h + b1_ref[...], 0.0)                # (hidden, TB)

    # fc2 (cast activations back to the compute dtype for the MXU)
    y = jnp.dot(w2T_ref[...], h.astype(w2T_ref.dtype),
                preferred_element_type=jnp.float32)
    y = y + b2_ref[...]                                  # (action_dim, TB)

    if eb_sb:
        y = jnp.tanh(y) * action_bound                   # EUP tanh, VPU mul
    else:
        y = jnp.clip(y, 0.0, action_bound)

    outT_ref[...] = y.astype(outT_ref.dtype)             # lane-dense store


def policy_net_forward(x, w1, b1, w2, b2, *, eb_sb: bool, action_bound: float,
                       compute_dtype=jnp.bfloat16, tb_max: int = 4096):
    """x: (B, state_dim); w1: (state_dim, hidden); b1: (hidden,) or (1, hidden);
       w2: (hidden, action_dim); b2: (action_dim,) or (1, action_dim).
       Returns (B, action_dim) float32."""
    B, state_dim = x.shape
    hidden = w1.shape[1]
    action_dim = w2.shape[1]

    # Batch tile: large (amortize ~0.35us/step overhead), multiple of 128 so
    # the lane axis is dense, capped well under the scoped VMEM limit on every
    # generation (v7x: 32 MiB scoped / 64 MiB phys). Per step the VMEM footprint
    # is ~ (2*state_dim*bf16 + 2*action_dim*f32 + hidden*f32) * TB  ~= 0.25 KiB/row,
    # so TB=4096 is ~1 MiB: no vmem_limit_bytes override needed.
    TB = min(int(tb_max), _round_up(B, 128))
    B_pad = _round_up(B, TB)
    num_tiles = pl.cdiv(B_pad, TB)

    # Wrapper-side layout plumbing (batch on lanes) + dtype cast of the big
    # streams; weights are pre-transposed so the kernel does plain dots.
    xT = jnp.pad(x.astype(compute_dtype).T, ((0, 0), (0, B_pad - B)))   # (S, Bp)
    w1T = w1.T.astype(compute_dtype)                                     # (H, S)
    w2T = w2.T.astype(compute_dtype)                                     # (A, H)
    b1c = b1.reshape(hidden, 1).astype(jnp.float32)                      # (H, 1)
    b2c = b2.reshape(action_dim, 1).astype(jnp.float32)                  # (A, 1)

    kernel = functools.partial(
        _policy_net_kernel, eb_sb=bool(eb_sb), action_bound=float(action_bound)
    )

    outT = pl.pallas_call(
        kernel,
        out_shape=jax.ShapeDtypeStruct((action_dim, B_pad), jnp.float32),
        grid=(num_tiles,),
        in_specs=[
            # x streams along the batch (lane) axis; weights/biases stay
            # resident in VMEM across the whole grid (index_map -> (0, 0)).
            pl.BlockSpec((state_dim, TB), lambda i: (0, i)),
            pl.BlockSpec((hidden, state_dim), lambda i: (0, 0)),
            pl.BlockSpec((hidden, 1), lambda i: (0, 0)),
            pl.BlockSpec((action_dim, hidden), lambda i: (0, 0)),
            pl.BlockSpec((action_dim, 1), lambda i: (0, 0)),
        ],
        out_specs=pl.BlockSpec((action_dim, TB), lambda i: (0, i)),
        compiler_params=pltpu.CompilerParams(
            dimension_semantics=("parallel",),   # shards batch across TCs on v7x
        ),
    )(xT, w1T, b1c, w2T, b2c)

    return outT[:, :B].T                                 # (B, action_dim)


def _init_linear(key, in_dim, out_dim):
    # Deterministic init mimicking torch.nn.Linear's uniform(-1/sqrt(in), 1/sqrt(in)).
    kw, kb = jax.random.split(key)
    bound = 1.0 / jnp.sqrt(jnp.float32(in_dim))
    # Stored as (in_dim, out_dim) == W^T so the math is x @ W (+ b).
    w = jax.random.uniform(kw, (in_dim, out_dim), jnp.float32, -bound, bound)
    b = jax.random.uniform(kb, (out_dim,), jnp.float32, -bound, bound)
    return w, b


def _reference(x, w1, b1, w2, b2, eb_sb, action_bound):
    h = jnp.maximum(x @ w1 + b1, 0.0)
    y = h @ w2 + b2
    return jnp.tanh(y) * action_bound if eb_sb else jnp.clip(y, 0.0, action_bound)


if __name__ == "__main__":
    state_dim, hidden_dim, action_dim = 16, 32, 8
    action_bound = 2.0

    key = jax.random.PRNGKey(0)
    k_x, k_x2, k_fc1, k_fc2 = jax.random.split(key, 4)

    w1, b1 = _init_linear(k_fc1, state_dim, hidden_dim)
    w2, b2 = _init_linear(k_fc2, hidden_dim, action_dim)

    ok = True

    # Case 1: small batch, f32 compute, eb_sb=True -> tight tolerance.
    x_small = jax.random.normal(k_x, (8, state_dim), jnp.float32)
    out = policy_net_forward(x_small, w1, b1, w2, b2, eb_sb=True,
                             action_bound=action_bound,
                             compute_dtype=jnp.float32)
    jax.block_until_ready(out)
    ref = _reference(x_small, w1, b1, w2, b2, True, action_bound)
    ok &= bool(jnp.allclose(out, ref, atol=1e-5, rtol=1e-5))

    # Case 2: small batch, bf16 streams, eb_sb=True -> loose tolerance.
    out = policy_net_forward(x_small, w1, b1, w2, b2, eb_sb=True,
                             action_bound=action_bound,
                             compute_dtype=jnp.bfloat16)
    jax.block_until_ready(out)
    ok &= bool(jnp.allclose(out, ref, atol=3e-2, rtol=3e-2))

    # Case 3: multi-tile grid (B=300 padded to 3 tiles of 128), bf16, eb_sb=False.
    x_big = jax.random.normal(k_x2, (300, state_dim), jnp.float32)
    out = policy_net_forward(x_big, w1, b1, w2, b2, eb_sb=False,
                             action_bound=action_bound,
                             compute_dtype=jnp.bfloat16, tb_max=128)
    jax.block_until_ready(out)
    ref = _reference(x_big, w1, b1, w2, b2, False, action_bound)
    ok &= bool(jnp.allclose(out, ref, atol=3e-2, rtol=3e-2))

    if ok:
        print("KERNEL_OK")
    else:
        print("KERNEL_MISMATCH")
</pallas_src>

<mosaic_0001>
module attributes {stable_mosaic.version = 11 : i64} {
  func.func @_policy_net_kernel(%arg0: i32, %arg1: memref<16x128xf32, #tpu.memory_space<vmem>>, %arg2: memref<32x16xf32, #tpu.memory_space<vmem>>, %arg3: memref<32x1xf32, #tpu.memory_space<vmem>>, %arg4: memref<8x32xf32, #tpu.memory_space<vmem>>, %arg5: memref<8x1xf32, #tpu.memory_space<vmem>>, %arg6: memref<8x128xf32, #tpu.memory_space<vmem>>) attributes {dimension_semantics = [#tpu.dimension_semantics<parallel>], iteration_bounds = array<i64: 1>, scalar_prefetch = 0 : i64, scratch_operands = 0 : i64, tpu.core_type = #tpu.core_type<tc>, window_params = [{transform_indices = @transform_0, window_bounds = array<i64: 16, 128>}, {pipeline_mode = #tpu.pipeline_mode<synchronous>, transform_indices = @transform_1, window_bounds = array<i64: 32, 16>}, {pipeline_mode = #tpu.pipeline_mode<synchronous>, transform_indices = @transform_2, window_bounds = array<i64: 32, 1>}, {pipeline_mode = #tpu.pipeline_mode<synchronous>, transform_indices = @transform_3, window_bounds = array<i64: 8, 32>}, {pipeline_mode = #tpu.pipeline_mode<synchronous>, transform_indices = @transform_4, window_bounds = array<i64: 8, 1>}, {transform_indices = @transform_5, window_bounds = array<i64: 8, 128>}]} {
    %c0 = arith.constant 0 : index
    %c0_0 = arith.constant 0 : index
    %0 = vector.load %arg2[%c0, %c0_0] : memref<32x16xf32, #tpu.memory_space<vmem>>, vector<32x16xf32>
    %c0_1 = arith.constant 0 : index
    %c0_2 = arith.constant 0 : index
    %1 = vector.load %arg1[%c0_1, %c0_2] : memref<16x128xf32, #tpu.memory_space<vmem>>, vector<16x128xf32>
    %cst = arith.constant dense<0.000000e+00> : vector<32x128xf32>
    %2 = tpu.matmul %0, %1, %cst {dimension_numbers = #tpu.dot_dimension_numbers<[1], [0], [0], [1], [0, 0, 1, 1], [], []>} : vector<32x16xf32>, vector<16x128xf32>, vector<32x128xf32> -> vector<32x128xf32>
    %c0_3 = arith.constant 0 : index
    %c0_4 = arith.constant 0 : index
    %3 = vector.load %arg3[%c0_3, %c0_4] : memref<32x1xf32, #tpu.memory_space<vmem>>, vector<32x1xf32>
    %4 = vector.broadcast %3 : vector<32x1xf32> to vector<32x128xf32>
    %5 = arith.addf %2, %4 : vector<32x128xf32>
    %cst_5 = arith.constant 0.000000e+00 : f32
    %6 = vector.broadcast %cst_5 : f32 to vector<32x128xf32>
    %7 = arith.maximumf %5, %6 : vector<32x128xf32>
    %c0_6 = arith.constant 0 : index
    %c0_7 = arith.constant 0 : index
    %8 = vector.load %arg4[%c0_6, %c0_7] : memref<8x32xf32, #tpu.memory_space<vmem>>, vector<8x32xf32>
    %cst_8 = arith.constant dense<0.000000e+00> : vector<8x128xf32>
    %9 = tpu.matmul %8, %7, %cst_8 {dimension_numbers = #tpu.dot_dimension_numbers<[1], [0], [0], [1], [0, 0, 1, 1], [], []>} : vector<8x32xf32>, vector<32x128xf32>, vector<8x128xf32> -> vector<8x128xf32>
    %c0_9 = arith.constant 0 : index
    %c0_10 = arith.constant 0 : index
    %10 = vector.load %arg5[%c0_9, %c0_10] : memref<8x1xf32, #tpu.memory_space<vmem>>, vector<8x1xf32>
    %11 = vector.broadcast %10 : vector<8x1xf32> to vector<8x128xf32>
    %12 = arith.addf %9, %11 : vector<8x128xf32>
    %13 = math.tanh %12 : vector<8x128xf32>
    %cst_11 = arith.constant 2.000000e+00 : f32
    %14 = vector.broadcast %cst_11 : f32 to vector<8x128xf32>
    %15 = arith.mulf %13, %14 : vector<8x128xf32>
    %c0_12 = arith.constant 0 : index
    %c0_13 = arith.constant 0 : index
    %16 = vector.load %arg6[%c0_12, %c0_13] : memref<8x128xf32, #tpu.memory_space<vmem>>, vector<8x128xf32>
    tpu.vector_store %arg6[%c0_12, %c0_13], %15 {strides = array<i32>} : memref<8x128xf32, #tpu.memory_space<vmem>>, vector<8x128xf32>,
    return
  }
  func.func @transform_0(%arg0: i32) -> (i32, i32) {
    %c0_i32 = arith.constant 0 : i32
    %c0_i32_0 = arith.constant 0 : i32
    return %c0_i32, %arg0 : i32, i32
  }
  func.func @transform_1(%arg0: i32) -> (i32, i32) {
    %c0_i32 = arith.constant 0 : i32
    %c0_i32_0 = arith.constant 0 : i32
    %c0_i32_1 = arith.constant 0 : i32
    return %c0_i32, %c0_i32_0 : i32, i32
  }
  func.func @transform_2(%arg0: i32) -> (i32, i32) {
    %c0_i32 = arith.constant 0 : i32
    %c0_i32_0 = arith.constant 0 : i32
    %c0_i32_1 = arith.constant 0 : i32
    return %c0_i32, %c0_i32_0 : i32, i32
  }
  func.func @transform_3(%arg0: i32) -> (i32, i32) {
    %c0_i32 = arith.constant 0 : i32
    %c0_i32_0 = arith.constant 0 : i32
    %c0_i32_1 = arith.constant 0 : i32
    return %c0_i32, %c0_i32_0 : i32, i32
  }
  func.func @transform_4(%arg0: i32) -> (i32, i32) {
    %c0_i32 = arith.constant 0 : i32
    %c0_i32_0 = arith.constant 0 : i32
    %c0_i32_1 = arith.constant 0 : i32
    return %c0_i32, %c0_i32_0 : i32, i32
  }
  func.func @transform_5(%arg0: i32) -> (i32, i32) {
    %c0_i32 = arith.constant 0 : i32
    %c0_i32_0 = arith.constant 0 : i32
    return %c0_i32, %arg0 : i32, i32
  }
}

</mosaic_0001>

<llo_original>
// kernel: tpu_custom_call.1
$region0: #{tpu_custom_call.1}
  #allocation0 [shape = 'u32[]', space=smem, size = 0x4, offset = 0x4, fixed_abs, tag = 'smem constant byte address 0x4 - core index']
  #allocation1 [shape = 'u32[144,128]{1,0:T(1,128)}', space=vmem, size = 0x12000, scoped, tag = 'internal scratch']
  %s0 = inlined_call_operand.vmem [shape: f32[16,128], index: 0, kind: input, shape index: {}]
  %s1 = inlined_call_operand.vmem [shape: f32[32,16], index: 1, kind: input, shape index: {}]
  %s2 = inlined_call_operand.vmem [shape: f32[32,1], index: 2, kind: input, shape index: {}]
  %s3 = inlined_call_operand.vmem [shape: f32[8,32], index: 3, kind: input, shape index: {}]
  %s4 = inlined_call_operand.vmem [shape: f32[8,1], index: 4, kind: input, shape index: {}]
  %s5 = inlined_call_operand.hbm [shape: f32[8,128], index: 5, kind: output, shape index: {}]
  %s6 = sld [smem:[#allocation0]]
  $region30: #{tpu_custom_call.1} parent=0
    _
  %s8 = ssub.s32 1, %s6
  %s9 = scalar_select 0, %s8, %s6
  $region1: #{tpu_custom_call.1} parent=0
    #allocation2 [shape = 'u8[4096]{0}', space=vmem, size = 0x1000, scoped, tag = 'output window, operand 0, single buffered']
    #allocation3 [shape = 's32[1]{0}', space=sflag, size = 0x4, scoped, tag = 'scoped memory for tpu_custom_call.1']
    %10 = vsyncpa [#allocation3], 0
    // Predicated region
    $region2: #{tpu_custom_call.1} parent=1 // pred_check
      _
    $region3: #{tpu_custom_call.1} parent=1 // pred_check_branch
      %12 = sbr.rel (0) target = $region5
    $region4: #{tpu_custom_call.1} parent=1 // pred_region
      _
    $region5: #{tpu_custom_call.1} parent=1 // pred_fallthru
      _
    // Predicated region
    $region6: #{tpu_custom_call.1} parent=1 // pred_check
      _
    $region7: #{tpu_custom_call.1} parent=1 // pred_check_branch
      %14 = sbr.rel (0) target = $region9
    $region8: #{tpu_custom_call.1} parent=1 // pred_region
      _
    $region9: #{tpu_custom_call.1} parent=1 // pred_fallthru
      _
    // Predicated region
    $region10: #{tpu_custom_call.1} parent=1 // pred_check
      _
    $region11: #{tpu_custom_call.1} parent=1 // pred_check_branch
      %16 = sbr.rel (0) target = $region13
    $region12: #{tpu_custom_call.1} parent=1 // pred_region
      _
    $region13: #{tpu_custom_call.1} parent=1 // pred_fallthru
      _
    // Predicated region
    $region14: #{tpu_custom_call.1} parent=1 // pred_check
      _
    $region15: #{tpu_custom_call.1} parent=1 // pred_check_branch
      %18 = sbr.rel (0) target = $region17
    $region16: #{tpu_custom_call.1} parent=1 // pred_region
      _
    $region17: #{tpu_custom_call.1} parent=1 // pred_fallthru
      _
    // Predicated region
    $region18: #{tpu_custom_call.1} parent=1 // pred_check
      _
    $region19: #{tpu_custom_call.1} parent=1 // pred_check_branch
      %20 = sbr.rel (0) target = $region21
    $region20: #{tpu_custom_call.1} parent=1 // pred_region
      _
    $region21: #{tpu_custom_call.1} parent=1 // pred_fallthru
      _
    %v21 = vld [vmem:[%s1] sm:$0xff]
    %v22 = vld [vmem:[%s1 + $0x8] sm:$0xff]
    %v23 = vld [vmem:[%s1 + $0x10] sm:$0xff]
    %v24 = vld [vmem:[%s1 + $0x18] sm:$0xff]
    %v25 = vld [vmem:[%s0] sm:$0xff]
    %v26 = vld [vmem:[%s0 + $0x8] sm:$0xff]
    %v27 = vld [vmem:[%s2] sm:$0xff]
    %v28 = vld [vmem:[%s2 + $0x8] sm:$0xff]
    %v29 = vld [vmem:[%s2 + $0x10] sm:$0xff]
    %v30 = vld [vmem:[%s2 + $0x18] sm:$0xff]
    %32 = vset.pattern.permute.xlu0 0
    %33 = vperm.xlu0 %32, %v27
    %v34 = vpop.permute.xlu0 %33
    %37 = vset.pattern.permute.xlu0 0
    %38 = vperm.xlu0 %37, %v28
    %v39 = vpop.permute.xlu0 %38
    %42 = vset.pattern.permute.xlu0 0
    %43 = vperm.xlu0 %42, %v29
    %v44 = vpop.permute.xlu0 %43
    %47 = vset.pattern.permute.xlu0 0
    %48 = vperm.xlu0 %47, %v30
    %v49 = vpop.permute.xlu0 %48
    %vm51 = vcmask 130048
    %v53 = vsel %vm51, %v21, 0
    %v56 = vsel %vm51, %v22, 0
    %v59 = vsel %vm51, %v23, 0
    %v62 = vsel %vm51, %v24, 0
    %64 = vmatprep.subr.mxu0 0.0
    %65 = vmatpush1.msra.mxu0 %v25
    %66 = vmatprep.subr.mxu0 0.0
    %67 = vmatpush1.msra.mxu0 %v26
    %68 = vmatprep.subr.mxu0 0.0
    %69 = vmatpush1.msra.mxu0 0.0
    %70 = vmatprep.subr.mxu0 0.0
    %71 = vmatpush1.msra.mxu0 0.0
    %72 = vmatprep.subr.mxu0 0.0
    %73 = vmatpush1.msra.mxu0 0.0
    %74 = vmatprep.subr.mxu0 0.0
    %75 = vmatpush1.msra.mxu0 0.0
    %76 = vmatprep.subr.mxu0 0.0
    %77 = vmatpush1.msra.mxu0 0.0
    %78 = vmatprep.subr.mxu0 0.0
    %79 = vmatpush1.msra.mxu0 0.0
    %80 = vmatprep.subr.mxu0 0.0
    %81 = vmatpush1.msra.mxu0 0.0
    %82 = vmatprep.subr.mxu0 0.0
    %83 = vmatpush1.msra.mxu0 0.0
    %84 = vmatprep.subr.mxu0 0.0
    %85 = vmatpush1.msra.mxu0 0.0
    %86 = vmatprep.subr.mxu0 0.0
    %87 = vmatpush1.msra.mxu0 0.0
    %88 = vmatprep.subr.mxu0 0.0
    %89 = vmatpush1.msra.mxu0 0.0
    %90 = vmatprep.subr.mxu0 0.0
    %91 = vmatpush1.msra.mxu0 0.0
    %92 = vmatprep.subr.mxu0 0.0
    %93 = vmatpush1.msra.mxu0 0.0
    %94 = vmatprep.subr.mxu0 0.0
    %95 = vmatpush1.msra.mxu0 0.0
    %96 = vmatprep.subr.mxu0 0.0
    %97 = vmatpush1.msra.mxu0 0.0
    %98 = vmatprep.subr.mxu0 0.0
    %99 = vmatpush1.msra.mxu0 0.0
    %100 = vmatprep.subr.mxu0 0.0
    %101 = vmatpush1.msra.mxu0 0.0
    %102 = vmatprep.subr.mxu0 0.0
    %103 = vmatpush1.msra.mxu0 0.0
    %104 = vmatprep.subr.mxu0 0.0
    %105 = vmatpush1.msra.mxu0 0.0
    %106 = vmatprep.subr.mxu0 0.0
    %107 = vmatpush1.msra.mxu0 0.0
    %108 = vmatprep.subr.mxu0 0.0
    %109 = vmatpush1.msra.mxu0 0.0
    %110 = vmatprep.subr.mxu0 0.0
    %111 = vmatpush1.msra.mxu0 0.0
    %112 = vmatprep.subr.mxu0 0.0
    %113 = vmatpush1.msra.mxu0 0.0
    %114 = vmatprep.subr.mxu0 0.0
    %115 = vmatpush1.msra.mxu0 0.0
    %116 = vmatprep.subr.mxu0 0.0
    %117 = vmatpush1.msra.mxu0 0.0
    %118 = vmatprep.subr.mxu0 0.0
    %119 = vmatpush1.msra.mxu0 0.0
    %120 = vmatprep.subr.mxu0 0.0
    %121 = vmatpush1.msra.mxu0 0.0
    %122 = vmatprep.subr.mxu0 0.0
    %123 = vmatpush1.msra.mxu0 0.0
    %124 = vmatprep.subr.mxu0 0.0
    %125 = vmatpush1.msra.mxu0 0.0
    %126 = vmatprep.subr.mxu0 0.0
    %127 = vmatpush1.msra.mxu0 0.0
    %128 = vmatprep.mubr.f32.mxu0 0.0
    %129 = vmatmul.mubr.f32.gmra.mrb[0].mxu0 %v53
    %v130 = vpop.f32.mrb[0].mxu0
    %v131 = vadd.f32 %v34, %v130
    %v132 = vpop.f32.mrb[0].mxu0
    %133 = vmatprep.mubr.f32.mxu0 0.0
    %134 = vmatmul.mubr.f32.gmra.mrb[0].mxu0 %v56
    %v135 = vpop.f32.mrb[0].mxu0
    %v136 = vadd.f32 %v39, %v135
    %v137 = vpop.f32.mrb[0].mxu0
    %138 = vmatprep.mubr.f32.mxu0 0.0
    %139 = vmatmul.mubr.f32.gmra.mrb[0].mxu0 %v59
    %v140 = vpop.f32.mrb[0].mxu0
    %v141 = vadd.f32 %v44, %v140
    %v142 = vpop.f32.mrb[0].mxu0
    %143 = vmatprep.mubr.f32.mxu0 0.0
    %144 = vmatmul.mubr.f32.gmra.mrb[0].mxu0 %v62
    %v145 = vpop.f32.mrb[0].mxu0
    %v146 = vadd.f32 %v49, %v145
    %v147 = vpop.f32.mrb[0].mxu0
    %148 = vdwg.mxu0
    %v149 = vmax.f32 %v131, 0.0
    %v150 = vmax.f32 %v136, 0.0
    %v151 = vmax.f32 %v141, 0.0
    %v152 = vmax.f32 %v146, 0.0
    %v153 = vld [vmem:[%s3] sm:$0xff]
    %v154 = vld [vmem:[%s4] sm:$0xff]
    %156 = vset.pattern.permute.xlu0 0
    %157 = vperm.xlu0 %156, %v154
    %v158 = vpop.permute.xlu0 %157
    %vm160 = vcmask 261120
    %v162 = vsel %vm160, %v153, 0
    %164 = vmatprep.subr.mxu0 0.0
    %165 = vmatpush1.msra.mxu0 %v149
    %166 = vmatprep.subr.mxu0 0.0
    %167 = vmatpush1.msra.mxu0 %v150
    %168 = vmatprep.subr.mxu0 0.0
    %169 = vmatpush1.msra.mxu0 %v151
    %170 = vmatprep.subr.mxu0 0.0
    %171 = vmatpush1.msra.mxu0 %v152
    %172 = vmatprep.subr.mxu0 0.0
    %173 = vmatpush1.msra.mxu0 0.0
    %174 = vmatprep.subr.mxu0 0.0
    %175 = vmatpush1.msra.mxu0 0.0
    %176 = vmatprep.subr.mxu0 0.0
    %177 = vmatpush1.msra.mxu0 0.0
    %178 = vmatprep.subr.mxu0 0.0
    %179 = vmatpush1.msra.mxu0 0.0
    %180 = vmatprep.subr.mxu0 0.0
    %181 = vmatpush1.msra.mxu0 0.0
    %182 = vmatprep.subr.mxu0 0.0
    %183 = vmatpush1.msra.mxu0 0.0
    %184 = vmatprep.subr.mxu0 0.0
    %185 = vmatpush1.msra.mxu0 0.0
    %186 = vmatprep.subr.mxu0 0.0
    %187 = vmatpush1.msra.mxu0 0.0
    %188 = vmatprep.subr.mxu0 0.0
    %189 = vmatpush1.msra.mxu0 0.0
    %190 = vmatprep.subr.mxu0 0.0
    %191 = vmatpush1.msra.mxu0 0.0
    %192 = vmatprep.subr.mxu0 0.0
    %193 = vmatpush1.msra.mxu0 0.0
    %194 = vmatprep.subr.mxu0 0.0
    %195 = vmatpush1.msra.mxu0 0.0
    %196 = vmatprep.subr.mxu0 0.0
    %197 = vmatpush1.msra.mxu0 0.0
    %198 = vmatprep.subr.mxu0 0.0
    %199 = vmatpush1.msra.mxu0 0.0
    %200 = vmatprep.subr.mxu0 0.0
    %201 = vmatpush1.msra.mxu0 0.0
    %202 = vmatprep.subr.mxu0 0.0
    %203 = vmatpush1.msra.mxu0 0.0
    %204 = vmatprep.subr.mxu0 0.0
    %205 = vmatpush1.msra.mxu0 0.0
    %206 = vmatprep.subr.mxu0 0.0
    %207 = vmatpush1.msra.mxu0 0.0
    %208 = vmatprep.subr.mxu0 0.0
    %209 = vmatpush1.msra.mxu0 0.0
    %210 = vmatprep.subr.mxu0 0.0
    %211 = vmatpush1.msra.mxu0 0.0
    %212 = vmatprep.subr.mxu0 0.0
    %213 = vmatpush1.msra.mxu0 0.0
    %214 = vmatprep.subr.mxu0 0.0
    %215 = vmatpush1.msra.mxu0 0.0
    %216 = vmatprep.subr.mxu0 0.0
    %217 = vmatpush1.msra.mxu0 0.0
    %218 = vmatprep.subr.mxu0 0.0
    %219 = vmatpush1.msra.mxu0 0.0
    %220 = vmatprep.subr.mxu0 0.0
    %221 = vmatpush1.msra.mxu0 0.0
    %222 = vmatprep.subr.mxu0 0.0
    %223 = vmatpush1.msra.mxu0 0.0
    %224 = vmatprep.subr.mxu0 0.0
    %225 = vmatpush1.msra.mxu0 0.0
    %226 = vmatprep.subr.mxu0 0.0
    %227 = vmatpush1.msra.mxu0 0.0
    %228 = vmatprep.mubr.f32.mxu0 0.0
    %229 = vmatmul.mubr.f32.gmra.mrb[0].mxu0 %v162
    %v230 = vpop.f32.mrb[0].mxu0
    %v231 = vadd.f32 %v158, %v230
    %v232 = vpop.f32.mrb[0].mxu0
    %233 = vdwg.mxu0
    %v234 = vtanh.pop %v231
    %v235 = vmul.f32 %v234, 2.0
    %236 = vst [vmem:[#allocation2] sm:$0xff] %v235
    // Predicated region
    $region22: #{tpu_custom_call.1} parent=1 // pred_check
      _
    $region23: #{tpu_custom_call.1} parent=1 // pred_check_branch
      %238 = sbr.rel (0) target = $region25
    $region24: #{tpu_custom_call.1} parent=1 // pred_region
      %s240 = ssub.s32 128, 128
      %241 = vsyncadd [#allocation3], %s240
      %s243 = sshll.u32 [#allocation2], 4
      %s244 = int_to_ptr.vmem [resolvable:$true] %s243
      %246 = dma.vmem_to_hbm [thread:$0]  %s244, 128, %s5, [#allocation3]
    $region25: #{tpu_custom_call.1} parent=1 // pred_fallthru
      _
    // Predicated region
    $region26: #{tpu_custom_call.1} parent=1 // pred_check
      _
    $region27: #{tpu_custom_call.1} parent=1 // pred_check_branch
      %248 = sbr.rel (0) target = $region29
    $region28: #{tpu_custom_call.1} parent=1 // pred_region
      %249 = dma.done [#allocation3], 128
    $region29: #{tpu_custom_call.1} parent=1 // pred_fallthru
      _
    %250 = vsyncpa [#allocation3], 1

</llo_original>
